<compile_context>
chip_gen: v5e
topology: v5e:2x2
jax: 0.10.0
libtpu: 0.0.40
codegen_flags: <defaults>
</compile_context>

<pallas_src>
import jax
import jax.numpy as jnp
from jax import lax
from jax.experimental import pallas as pl
from jax.experimental.pallas import tpu as pltpu

# dot(A, B^T): contract lhs dim 1 with rhs dim 1 (same pattern as TPU flash attention).
_TRANS_B_DIMS = (((1,), (1,)), ((), ()))


def _mlp_kernel(x_ref, w1_ref, b1_ref, w2_ref, b2_ref, o_ref):
    x = x_ref[...].astype(jnp.float32)      # (TILE_B, IN)   batch-major input tile
    w1 = w1_ref[...].astype(jnp.float32)    # (HID, IN)      PyTorch (out, in) layout
    b1 = b1_ref[...].astype(jnp.float32)    # (HID, 1)
    w2 = w2_ref[...].astype(jnp.float32)    # (OUT, HID)
    b2 = b2_ref[...].astype(jnp.float32)    # (OUT, 1)

    # h_t[j, b] = sum_k w1[j, k] * x[b, k]  -> (HID, TILE_B): batch lives on lanes.
    h_t = lax.dot_general(w1, x, _TRANS_B_DIMS,
                          preferred_element_type=jnp.float32) + b1
    h_t = jnp.maximum(h_t, 0.0)             # ReLU
    # y_t = w2 @ h_t + b2 -> (OUT, TILE_B): lane-dense output tile.
    y_t = jnp.dot(w2, h_t, preferred_element_type=jnp.float32) + b2
    o_ref[...] = y_t.astype(o_ref.dtype)


def simple_model_forward(x, w1, b1, w2, b2, *, tile_b=2048):
    """x: (B, 10); w1: (5, 10); b1: (5,); w2: (2, 5); b2: (2,)  ->  (B, 2)."""
    B, in_f = x.shape
    hid, out_f = w1.shape[0], w2.shape[0]
    assert w1.shape == (hid, in_f) and w2.shape == (out_f, hid)
    assert b1.shape == (hid,) and b2.shape == (out_f,)

    # Tile: multiple of 128 (so the (OUT, TILE_B) output block is lane-dense and the
    # (TILE_B, IN) input block is sublane-aligned), capped by the 128-rounded batch.
    tile_b = max(128, (int(tile_b) // 128) * 128)
    tile_b = min(tile_b, pl.cdiv(B, 128) * 128)
    b_pad = pl.cdiv(B, tile_b) * tile_b
    if b_pad != B:
        x = jnp.pad(x, ((0, b_pad - B), (0, 0)))

    b1_col = b1.reshape(hid, 1)
    b2_col = b2.reshape(out_f, 1)

    itemsize = jnp.dtype(x.dtype).itemsize
    cost = pl.CostEstimate(
        flops=2 * b_pad * (in_f * hid + hid * out_f),
        transcendentals=0,
        bytes_accessed=b_pad * (in_f + out_f) * itemsize
        + 4 * (w1.size + w2.size + b1.size + b2.size),
    )

    out_t = pl.pallas_call(
        _mlp_kernel,
        out_shape=jax.ShapeDtypeStruct((out_f, b_pad), x.dtype),
        grid=(b_pad // tile_b,),
        in_specs=[
            pl.BlockSpec((tile_b, in_f), lambda i: (i, 0)),   # x: streamed / pipelined
            pl.BlockSpec((hid, in_f), lambda i: (0, 0)),      # w1: resident
            pl.BlockSpec((hid, 1), lambda i: (0, 0)),         # b1: resident
            pl.BlockSpec((out_f, hid), lambda i: (0, 0)),     # w2: resident
            pl.BlockSpec((out_f, 1), lambda i: (0, 0)),       # b2: resident
        ],
        out_specs=pl.BlockSpec((out_f, tile_b), lambda i: (0, i)),  # lane-dense output
        compiler_params=pltpu.CompilerParams(
            dimension_semantics=("parallel",),        # megacore-shardable batch axis
            vmem_limit_bytes=32 * 1024 * 1024,        # safe on v5e/v6e/v7x
        ),
        cost_estimate=cost,
    )(x, w1, b1_col, w2, b2_col)

    # Tiny (2, B) slab -> (B, 2) to match PyTorch output layout.
    return out_t[:, :B].T


def _reference(x, w1, b1, w2, b2):
    h = jnp.maximum(x @ w1.T + b1, 0.0)
    return h @ w2.T + b2


if __name__ == "__main__":
    key = jax.random.PRNGKey(0)
    k_x, k_w1, k_b1, k_w2, k_b2, k_x2 = jax.random.split(key, 6)

    IN, HID, OUT = 10, 5, 2
    B = 1024  # small demo batch; tile_b=256 -> 4 pipelined grid steps

    lim1 = 1.0 / jnp.sqrt(IN)
    lim2 = 1.0 / jnp.sqrt(HID)
    x = jax.random.normal(k_x, (B, IN), dtype=jnp.float32)
    # PyTorch-layout (out_features, in_features) weights, uniform(+-1/sqrt(fan_in)) init.
    w1 = jax.random.uniform(k_w1, (HID, IN), minval=-lim1, maxval=lim1, dtype=jnp.float32)
    b1 = jax.random.uniform(k_b1, (HID,), minval=-lim1, maxval=lim1, dtype=jnp.float32)
    w2 = jax.random.uniform(k_w2, (OUT, HID), minval=-lim2, maxval=lim2, dtype=jnp.float32)
    b2 = jax.random.uniform(k_b2, (OUT,), minval=-lim2, maxval=lim2, dtype=jnp.float32)

    out = jax.block_until_ready(simple_model_forward(x, w1, b1, w2, b2, tile_b=256))
    ref = _reference(x, w1, b1, w2, b2)
    assert out.shape == (B, OUT), out.shape
    assert jnp.allclose(out, ref, atol=1e-4, rtol=1e-4), "mismatch vs reference"

    # Ragged batch (not a multiple of the tile) exercises the padding path.
    x2 = jax.random.normal(k_x2, (100, IN), dtype=jnp.float32)
    out2 = jax.block_until_ready(simple_model_forward(x2, w1, b1, w2, b2, tile_b=256))
    ref2 = _reference(x2, w1, b1, w2, b2)
    assert out2.shape == (100, OUT), out2.shape
    assert jnp.allclose(out2, ref2, atol=1e-4, rtol=1e-4), "mismatch vs reference (ragged)"

    print("KERNEL_OK")
</pallas_src>

<mosaic_0001>
module attributes {stable_mosaic.version = 11 : i64} {
  func.func @_mlp_kernel(%arg0: i32, %arg1: memref<256x10xf32, #tpu.memory_space<vmem>>, %arg2: memref<5x10xf32, #tpu.memory_space<vmem>>, %arg3: memref<5x1xf32, #tpu.memory_space<vmem>>, %arg4: memref<2x5xf32, #tpu.memory_space<vmem>>, %arg5: memref<2x1xf32, #tpu.memory_space<vmem>>, %arg6: memref<2x256xf32, #tpu.memory_space<vmem>>) attributes {dimension_semantics = [#tpu.dimension_semantics<parallel>], iteration_bounds = array<i64: 4>, scalar_prefetch = 0 : i64, scratch_operands = 0 : i64, tpu.core_type = #tpu.core_type<tc>, window_params = [{transform_indices = @transform_0, window_bounds = array<i64: 256, 10>}, {pipeline_mode = #tpu.pipeline_mode<synchronous>, transform_indices = @transform_1, window_bounds = array<i64: 5, 10>}, {pipeline_mode = #tpu.pipeline_mode<synchronous>, transform_indices = @transform_2, window_bounds = array<i64: 5, 1>}, {pipeline_mode = #tpu.pipeline_mode<synchronous>, transform_indices = @transform_3, window_bounds = array<i64: 2, 5>}, {pipeline_mode = #tpu.pipeline_mode<synchronous>, transform_indices = @transform_4, window_bounds = array<i64: 2, 1>}, {transform_indices = @transform_5, window_bounds = array<i64: 2, 256>}]} {
    %c0 = arith.constant 0 : index
    %c0_0 = arith.constant 0 : index
    %0 = vector.load %arg1[%c0, %c0_0] : memref<256x10xf32, #tpu.memory_space<vmem>>, vector<256x10xf32>
    %c0_1 = arith.constant 0 : index
    %c0_2 = arith.constant 0 : index
    %1 = vector.load %arg2[%c0_1, %c0_2] : memref<5x10xf32, #tpu.memory_space<vmem>>, vector<5x10xf32>
    %c0_3 = arith.constant 0 : index
    %c0_4 = arith.constant 0 : index
    %2 = vector.load %arg3[%c0_3, %c0_4] : memref<5x1xf32, #tpu.memory_space<vmem>>, vector<5x1xf32>
    %c0_5 = arith.constant 0 : index
    %c0_6 = arith.constant 0 : index
    %3 = vector.load %arg4[%c0_5, %c0_6] : memref<2x5xf32, #tpu.memory_space<vmem>>, vector<2x5xf32>
    %c0_7 = arith.constant 0 : index
    %c0_8 = arith.constant 0 : index
    %4 = vector.load %arg5[%c0_7, %c0_8] : memref<2x1xf32, #tpu.memory_space<vmem>>, vector<2x1xf32>
    %cst = arith.constant dense<0.000000e+00> : vector<5x256xf32>
    %5 = tpu.matmul %1, %0, %cst {dimension_numbers = #tpu.dot_dimension_numbers<[1], [1], [0], [0], [0, 0, 1, 0], [], []>} : vector<5x10xf32>, vector<256x10xf32>, vector<5x256xf32> -> vector<5x256xf32>
    %6 = vector.broadcast %2 : vector<5x1xf32> to vector<5x256xf32>
    %7 = arith.addf %5, %6 : vector<5x256xf32>
    %cst_9 = arith.constant 0.000000e+00 : f32
    %8 = vector.broadcast %cst_9 : f32 to vector<5x256xf32>
    %9 = arith.maximumf %7, %8 : vector<5x256xf32>
    %cst_10 = arith.constant dense<0.000000e+00> : vector<2x256xf32>
    %10 = tpu.matmul %3, %9, %cst_10 {dimension_numbers = #tpu.dot_dimension_numbers<[1], [0], [0], [1], [0, 0, 1, 1], [], []>} : vector<2x5xf32>, vector<5x256xf32>, vector<2x256xf32> -> vector<2x256xf32>
    %11 = vector.broadcast %4 : vector<2x1xf32> to vector<2x256xf32>
    %12 = arith.addf %10, %11 : vector<2x256xf32>
    %c0_11 = arith.constant 0 : index
    %c0_12 = arith.constant 0 : index
    %13 = vector.load %arg6[%c0_11, %c0_12] : memref<2x256xf32, #tpu.memory_space<vmem>>, vector<2x256xf32>
    tpu.vector_store %arg6[%c0_11, %c0_12], %12 {strides = array<i32>} : memref<2x256xf32, #tpu.memory_space<vmem>>, vector<2x256xf32>,
    return
  }
  func.func @transform_0(%arg0: i32) -> (i32, i32) {
    %c0_i32 = arith.constant 0 : i32
    %c0_i32_0 = arith.constant 0 : i32
    return %arg0, %c0_i32 : i32, i32
  }
  func.func @transform_1(%arg0: i32) -> (i32, i32) {
    %c0_i32 = arith.constant 0 : i32
    %c0_i32_0 = arith.constant 0 : i32
    %c0_i32_1 = arith.constant 0 : i32
    return %c0_i32, %c0_i32_0 : i32, i32
  }
  func.func @transform_2(%arg0: i32) -> (i32, i32) {
    %c0_i32 = arith.constant 0 : i32
    %c0_i32_0 = arith.constant 0 : i32
    %c0_i32_1 = arith.constant 0 : i32
    return %c0_i32, %c0_i32_0 : i32, i32
  }
  func.func @transform_3(%arg0: i32) -> (i32, i32) {
    %c0_i32 = arith.constant 0 : i32
    %c0_i32_0 = arith.constant 0 : i32
    %c0_i32_1 = arith.constant 0 : i32
    return %c0_i32, %c0_i32_0 : i32, i32
  }
  func.func @transform_4(%arg0: i32) -> (i32, i32) {
    %c0_i32 = arith.constant 0 : i32
    %c0_i32_0 = arith.constant 0 : i32
    %c0_i32_1 = arith.constant 0 : i32
    return %c0_i32, %c0_i32_0 : i32, i32
  }
  func.func @transform_5(%arg0: i32) -> (i32, i32) {
    %c0_i32 = arith.constant 0 : i32
    %c0_i32_0 = arith.constant 0 : i32
    return %c0_i32, %arg0 : i32, i32
  }
}

</mosaic_0001>

<llo_original>
// kernel: tpu_custom_call.1
$region0: #{tpu_custom_call.1}
  #allocation0 [shape = 'u32[]', space=smem, size = 0x4, offset = 0x4, fixed_abs, tag = 'smem constant byte address 0x4 - core index']
  #allocation1 [shape = 'u32[72,128]{1,0:T(1,128)}', space=vmem, size = 0x9000, scoped, tag = 'internal scratch']
  %s0 = inlined_call_operand.vmem [shape: f32[1024,10], index: 0, kind: input, shape index: {}]
  %s1 = inlined_call_operand.vmem [shape: f32[5,10], index: 1, kind: input, shape index: {}]
  %s2 = inlined_call_operand.vmem [shape: f32[5,1], index: 2, kind: input, shape index: {}]
  %s3 = inlined_call_operand.vmem [shape: f32[2,5], index: 3, kind: input, shape index: {}]
  %s4 = inlined_call_operand.vmem [shape: f32[2,1], index: 4, kind: input, shape index: {}]
  %s5 = inlined_call_operand.hbm [shape: f32[2,1024], index: 5, kind: output, shape index: {}]
  %s6 = sld [smem:[#allocation0]]
  $region53: #{tpu_custom_call.1} parent=0
    _
  %s8 = ssub.s32 1, %s6
  %s9 = scalar_select 0, %s8, %s6
  $region1: #{tpu_custom_call.1} parent=0
    #allocation2 [shape = 'u8[4096]{0}', space=vmem, size = 0x1000, scoped, tag = 'output window, operand 0']
    #allocation3 [shape = 's32[2]{0}', space=sflag, size = 0x8, scoped, tag = 'scoped memory for tpu_custom_call.1']
    %10 = vsyncpa [#allocation3], 0
    %s11 = scalar_lea.sflag [#allocation3], 1
    %12 = vsyncpa %s11, 0
    loop: start=0, step=1, limit=6
    $region2: #{tpu_custom_call.1} parent=1 // loop_pre_header
      _
    $region3: #{tpu_custom_call.1} parent=1 // loop_header
      %s14 = sphi 0, %s18
      %p15 = scmp.ge.s32.totalorder %s14, 6
      %s24 = sphi 0, %s26
      %s27 = sphi 0, %s24
      %s28 = sphi 0, %s27
      %s44 = sphi 0, %s28
      %s48 = sphi 0, %s48
      %s50 = sphi 0, %s48
      %s51 = sphi 0, %s50
      %s65 = sphi 0, %s51
      %s69 = sphi 0, %s69
      %s71 = sphi 0, %s69
      %s72 = sphi 0, %s71
      %s86 = sphi 0, %s72
      %s90 = sphi 0, %s90
      %s92 = sphi 0, %s90
      %s93 = sphi 0, %s92
      %s107 = sphi 0, %s93
      %s111 = sphi 0, %s111
      %s113 = sphi 0, %s111
      %s114 = sphi 0, %s113
      %s128 = sphi 0, %s114
      %s134 = sphi 0, %s136
      %s137 = sphi 0, %s134
      %s138 = sphi 0, %s137
      %s154 = sphi 0, %s138
    $region4: #{tpu_custom_call.1} parent=1 // loop_header_branch
      %17 = sbr.rel (%p15) target = $region8
    $region5: #{tpu_custom_call.1} parent=1 // loop_body
      %s19 = ssub.s32 %s14, 1
      %s20 = ssub.s32 %s14, 2
      %s21 = sadd.s32 %s14, 1
      %s22 = ssub.s32 %s14, %s21
      %p23 = scmp.eq.s32.totalorder %s22, 0
      %s25 = sadd.s32 %s24, 1
      %s26 = scalar_select %p23, %s24, %s25
      %p29 = pneg %p23
      %p30 = scmp.eq.s32.totalorder %s14, 3
      %p31 = por %p29, %p30
      %p32 = scmp.ne.s32.totalorder %s24, %s27
      %p33 = scmp.eq.s32.totalorder %s14, 0
      %p34 = por %p32, %p33
      %p35 = scmp.ne.s32.totalorder %s24, %s27
      %p36 = scmp.eq.s32.totalorder %s19, 3
      %p37 = por %p35, %p36
      %p38 = scmp.ne.s32.totalorder %s27, %s28
      %p39 = scmp.eq.s32.totalorder %s19, 0
      %p40 = por %p38, %p39
      %p41 = scmp.ne.s32.totalorder %s27, %s28
      %p42 = scmp.eq.s32.totalorder %s20, 3
      %p43 = por %p41, %p42
      %p45 = scmp.ne.s32.totalorder %s28, %s44
      %p46 = scmp.eq.s32.totalorder %s20, 0
      %p47 = por %p45, %p46
      %s49 = sadd.s32 %s48, 1
      %p52 = scmp.eq.s32.totalorder %s14, 3
      %p53 = scmp.ne.s32.totalorder %s48, %s50
      %p54 = scmp.eq.s32.totalorder %s14, 0
      %p55 = por %p53, %p54
      %p56 = scmp.ne.s32.totalorder %s48, %s50
      %p57 = scmp.eq.s32.totalorder %s19, 3
      %p58 = por %p56, %p57
      %p59 = scmp.ne.s32.totalorder %s50, %s51
      %p60 = scmp.eq.s32.totalorder %s19, 0
      %p61 = por %p59, %p60
      %p62 = scmp.ne.s32.totalorder %s50, %s51
      %p63 = scmp.eq.s32.totalorder %s20, 3
      %p64 = por %p62, %p63
      %p66 = scmp.ne.s32.totalorder %s51, %s65
      %p67 = scmp.eq.s32.totalorder %s20, 0
      %p68 = por %p66, %p67
      %s70 = sadd.s32 %s69, 1
      %p73 = scmp.eq.s32.totalorder %s14, 3
      %p74 = scmp.ne.s32.totalorder %s69, %s71
      %p75 = scmp.eq.s32.totalorder %s14, 0
      %p76 = por %p74, %p75
      %p77 = scmp.ne.s32.totalorder %s69, %s71
      %p78 = scmp.eq.s32.totalorder %s19, 3
      %p79 = por %p77, %p78
      %p80 = scmp.ne.s32.totalorder %s71, %s72
      %p81 = scmp.eq.s32.totalorder %s19, 0
      %p82 = por %p80, %p81
      %p83 = scmp.ne.s32.totalorder %s71, %s72
      %p84 = scmp.eq.s32.totalorder %s20, 3
      %p85 = por %p83, %p84
      %p87 = scmp.ne.s32.totalorder %s72, %s86
      %p88 = scmp.eq.s32.totalorder %s20, 0
      %p89 = por %p87, %p88
      %s91 = sadd.s32 %s90, 1
      %p94 = scmp.eq.s32.totalorder %s14, 3
      %p95 = scmp.ne.s32.totalorder %s90, %s92
      %p96 = scmp.eq.s32.totalorder %s14, 0
      %p97 = por %p95, %p96
      %p98 = scmp.ne.s32.totalorder %s90, %s92
      %p99 = scmp.eq.s32.totalorder %s19, 3
      %p100 = por %p98, %p99
      %p101 = scmp.ne.s32.totalorder %s92, %s93
      %p102 = scmp.eq.s32.totalorder %s19, 0
      %p103 = por %p101, %p102
      %p104 = scmp.ne.s32.totalorder %s92, %s93
      %p105 = scmp.eq.s32.totalorder %s20, 3
      %p106 = por %p104, %p105
      %p108 = scmp.ne.s32.totalorder %s93, %s107
      %p109 = scmp.eq.s32.totalorder %s20, 0
      %p110 = por %p108, %p109
      %s112 = sadd.s32 %s111, 1
      %p115 = scmp.eq.s32.totalorder %s14, 3
      %p116 = scmp.ne.s32.totalorder %s111, %s113
      %p117 = scmp.eq.s32.totalorder %s14, 0
      %p118 = por %p116, %p117
      %p119 = scmp.ne.s32.totalorder %s111, %s113
      %p120 = scmp.eq.s32.totalorder %s19, 3
      %p121 = por %p119, %p120
      %p122 = scmp.ne.s32.totalorder %s113, %s114
      %p123 = scmp.eq.s32.totalorder %s19, 0
      %p124 = por %p122, %p123
      %p125 = scmp.ne.s32.totalorder %s113, %s114
      %p126 = scmp.eq.s32.totalorder %s20, 3
      %p127 = por %p125, %p126
      %p129 = scmp.ne.s32.totalorder %s114, %s128
      %p130 = scmp.eq.s32.totalorder %s20, 0
      %p131 = por %p129, %p130
      %s132 = ssub.s32 %s14, %s21
      %p133 = scmp.eq.s32.totalorder %s132, 0
      %s135 = sadd.s32 %s134, 1
      %s136 = scalar_select %p133, %s134, %s135
      %p139 = pneg %p133
      %p140 = scmp.eq.s32.totalorder %s14, 3
      %p141 = por %p139, %p140
      %p142 = scmp.ne.s32.totalorder %s134, %s137
      %p143 = scmp.eq.s32.totalorder %s14, 0
      %p144 = por %p142, %p143
      %p145 = scmp.ne.s32.totalorder %s134, %s137
      %p146 = scmp.eq.s32.totalorder %s19, 3
      %p147 = por %p145, %p146
      %p148 = scmp.ne.s32.totalorder %s137, %s138
      %p149 = scmp.eq.s32.totalorder %s19, 0
      %p150 = por %p148, %p149
      %p151 = scmp.ne.s32.totalorder %s137, %s138
      %p152 = scmp.eq.s32.totalorder %s20, 3
      %p153 = por %p151, %p152
      %p155 = scmp.ne.s32.totalorder %s138, %s154
      %p156 = scmp.eq.s32.totalorder %s20, 0
      %p157 = por %p155, %p156
      %p158 = scmp.le.s32.totalorder 1, %s14
      %p159 = scmp.lt.s32.totalorder %s14, 5
      %p160 = pnand %p158, %p159
      %p161 = pneg %p160
      // Predicated region
      $region9: #{tpu_custom_call.1} parent=5 // pred_check
        _
      $region10: #{tpu_custom_call.1} parent=5 // pred_check_branch
        %163 = sbr.rel (%p160) target = $region12
      $region11: #{tpu_custom_call.1} parent=5 // pred_region
        %s164 = ssub.s32 %s14, 1
        // Predicated region
        $region13: #{tpu_custom_call.1} parent=11 // pred_check
          %p165 = pneg %p61
        $region14: #{tpu_custom_call.1} parent=11 // pred_check_branch
          %167 = sbr.rel (%p165) target = $region16
        $region15: #{tpu_custom_call.1} parent=11 // pred_region
          _
        $region16: #{tpu_custom_call.1} parent=11 // pred_fallthru
          _
        // Predicated region
        $region17: #{tpu_custom_call.1} parent=11 // pred_check
          %p168 = pneg %p82
        $region18: #{tpu_custom_call.1} parent=11 // pred_check_branch
          %170 = sbr.rel (%p168) target = $region20
        $region19: #{tpu_custom_call.1} parent=11 // pred_region
          _
        $region20: #{tpu_custom_call.1} parent=11 // pred_fallthru
          _
        // Predicated region
        $region21: #{tpu_custom_call.1} parent=11 // pred_check
          %p171 = pneg %p103
        $region22: #{tpu_custom_call.1} parent=11 // pred_check_branch
          %173 = sbr.rel (%p171) target = $region24
        $region23: #{tpu_custom_call.1} parent=11 // pred_region
          _
        $region24: #{tpu_custom_call.1} parent=11 // pred_fallthru
          _
        // Predicated region
        $region25: #{tpu_custom_call.1} parent=11 // pred_check
          %p174 = pneg %p124
        $region26: #{tpu_custom_call.1} parent=11 // pred_check_branch
          %176 = sbr.rel (%p174) target = $region28
        $region27: #{tpu_custom_call.1} parent=11 // pred_region
          _
        $region28: #{tpu_custom_call.1} parent=11 // pred_fallthru
          _
      $region12: #{tpu_custom_call.1} parent=5 // pred_fallthru
        _
      %p177 = scmp.lt.s32.totalorder %s14, 4
      // Predicated region
      $region29: #{tpu_custom_call.1} parent=5 // pred_check
        %p178 = pneg %p177
      $region30: #{tpu_custom_call.1} parent=5 // pred_check_branch
        %180 = sbr.rel (%p178) target = $region32
      $region31: #{tpu_custom_call.1} parent=5 // pred_region
        // Predicated region
        $region33: #{tpu_custom_call.1} parent=31 // pred_check
          %p181 = pneg %p34
        $region34: #{tpu_custom_call.1} parent=31 // pred_check_branch
          %183 = sbr.rel (%p181) target = $region36
        $region35: #{tpu_custom_call.1} parent=31 // pred_region
          %s184 = smul.u32 32, %s14
          %p185 = scmp.lt.s32.totalorder %s184, 127
          %s186 = scalar_select %p185, %s184, 127
          %s187 = smul.addr %s186, 8
          %s188 = scalar_lea.vmem %s0, %s187
          %s189 = smul.u32 32, %s14
        $region36: #{tpu_custom_call.1} parent=31 // pred_fallthru
          _
      $region32: #{tpu_custom_call.1} parent=5 // pred_fallthru
        _
      %p190 = scmp.le.s32.totalorder 1, %s14
      %p191 = scmp.lt.s32.totalorder %s14, 5
      %p192 = pnand %p190, %p191
      %p193 = pneg %p192
      // Predicated region
      $region37: #{tpu_custom_call.1} parent=5 // pred_check
        _
      $region38: #{tpu_custom_call.1} parent=5 // pred_check_branch
        %195 = sbr.rel (%p192) target = $region40
      $region39: #{tpu_custom_call.1} parent=5 // pred_region
        %s196 = ssub.s32 %s14, 1
        %s197 = smul.u32 32, %s19
        %p198 = scmp.lt.s32.totalorder %s197, 127
        %s199 = scalar_select %p198, %s197, 127
        %s200 = smul.addr %s199, 8
        %s201 = scalar_lea.vmem %s0, %s200
        %p202 = pneg %p40
        %p203 = pneg %p37
        %p204 = pneg %p61
        %p205 = pneg %p58
        %p206 = pneg %p82
        %p207 = pneg %p79
        %p208 = pneg %p103
        %p209 = pneg %p100
        %p210 = pneg %p124
        %p211 = pneg %p121
        %p212 = pneg %p150
        %p213 = pneg %p147
        %s214 = sand.u32 %s137, 1
        %s215 = scalar_lea.sflag [#allocation3], %s214
        %s216 = sand.u32 %s137, 1
        %s217 = smul.addr %s216, 4
        %s218 = scalar_lea.vmem [#allocation2], %s217
        %s219 = smul.u32 32, %s19
        %p220 = scmp.lt.s32.totalorder %s219, 127
        %s221 = scalar_select %p220, %s219, 127
        %s222 = smul.addr %s221, 8
        %s223 = scalar_lea.vmem %s0, %s222
        %s224 = smul.u32 32, %s19
        %s225 = smul.u32 2, %s19
        %v226 = vld [vmem:[%s223] sm:$0xff]
        %v227 = vld [vmem:[%s223 + $0x8] sm:$0xff]
        %v228 = vld [vmem:[%s223 + $0x10] sm:$0xff]
        %v229 = vld [vmem:[%s223 + $0x18] sm:$0xff]
        %v230 = vld [vmem:[%s223 + $0x20] sm:$0xff]
        %v231 = vld [vmem:[%s223 + $0x28] sm:$0xff]
        %v232 = vld [vmem:[%s223 + $0x30] sm:$0xff]
        %v233 = vld [vmem:[%s223 + $0x38] sm:$0xff]
        %v234 = vld [vmem:[%s223 + $0x40] sm:$0xff]
        %v235 = vld [vmem:[%s223 + $0x48] sm:$0xff]
        %v236 = vld [vmem:[%s223 + $0x50] sm:$0xff]
        %v237 = vld [vmem:[%s223 + $0x58] sm:$0xff]
        %v238 = vld [vmem:[%s223 + $0x60] sm:$0xff]
        %v239 = vld [vmem:[%s223 + $0x68] sm:$0xff]
        %v240 = vld [vmem:[%s223 + $0x70] sm:$0xff]
        %v241 = vld [vmem:[%s223 + $0x78] sm:$0xff]
        %v242 = vld [vmem:[%s223 + $0x80] sm:$0xff]
        %v243 = vld [vmem:[%s223 + $0x88] sm:$0xff]
        %v244 = vld [vmem:[%s223 + $0x90] sm:$0xff]
        %v245 = vld [vmem:[%s223 + $0x98] sm:$0xff]
        %v246 = vld [vmem:[%s223 + $0xa0] sm:$0xff]
        %v247 = vld [vmem:[%s223 + $0xa8] sm:$0xff]
        %v248 = vld [vmem:[%s223 + $0xb0] sm:$0xff]
        %v249 = vld [vmem:[%s223 + $0xb8] sm:$0xff]
        %v250 = vld [vmem:[%s223 + $0xc0] sm:$0xff]
        %v251 = vld [vmem:[%s223 + $0xc8] sm:$0xff]
        %v252 = vld [vmem:[%s223 + $0xd0] sm:$0xff]
        %v253 = vld [vmem:[%s223 + $0xd8] sm:$0xff]
        %v254 = vld [vmem:[%s223 + $0xe0] sm:$0xff]
        %v255 = vld [vmem:[%s223 + $0xe8] sm:$0xff]
        %v256 = vld [vmem:[%s223 + $0xf0] sm:$0xff]
        %v257 = vld [vmem:[%s223 + $0xf8] sm:$0xff]
        %v258 = vld [vmem:[%s1] sm:$0x1f]
        %v259 = vld [vmem:[%s2] sm:$0x1f]
        %v260 = vld [vmem:[%s3] sm:$0x3]
        %v261 = vld [vmem:[%s4] sm:$0x3]
        %263 = vset.pattern.permute.xlu0 0
        %264 = vperm.xlu0 %263, %v259
        %v265 = vpop.permute.xlu0 %264
        %vm267 = vcmask 80896
        %v269 = vsel %vm267, %v258, 0
        %v272 = vsel %vm267, %v226, 0
        %v275 = vsel %vm267, %v227, 0
        %v278 = vsel %vm267, %v228, 0
        %v281 = vsel %vm267, %v229, 0
        %v284 = vsel %vm267, %v230, 0
        %v287 = vsel %vm267, %v231, 0
        %v290 = vsel %vm267, %v232, 0
        %v293 = vsel %vm267, %v233, 0
        %v296 = vsel %vm267, %v234, 0
        %v299 = vsel %vm267, %v235, 0
        %v302 = vsel %vm267, %v236, 0
        %v305 = vsel %vm267, %v237, 0
        %v308 = vsel %vm267, %v238, 0
        %v311 = vsel %vm267, %v239, 0
        %v314 = vsel %vm267, %v240, 0
        %v317 = vsel %vm267, %v241, 0
        %v320 = vsel %vm267, %v242, 0
        %v323 = vsel %vm267, %v243, 0
        %v326 = vsel %vm267, %v244, 0
        %v329 = vsel %vm267, %v245, 0
        %v332 = vsel %vm267, %v246, 0
        %v335 = vsel %vm267, %v247, 0
        %v338 = vsel %vm267, %v248, 0
        %v341 = vsel %vm267, %v249, 0
        %v344 = vsel %vm267, %v250, 0
        %v347 = vsel %vm267, %v251, 0
        %v350 = vsel %vm267, %v252, 0
        %v353 = vsel %vm267, %v253, 0
        %v356 = vsel %vm267, %v254, 0
        %v359 = vsel %vm267, %v255, 0
        %v362 = vsel %vm267, %v256, 0
        %v365 = vsel %vm267, %v257, 0
        %367 = vmatpush.xpose.msra.mxu0 %v317
        %368 = vmatpush.xpose.msra.mxu0 %v314
        %369 = vmatpush.xpose.msra.mxu0 %v311
        %370 = vmatpush.xpose.msra.mxu0 %v308
        %371 = vmatpush.xpose.msra.mxu0 %v305
        %372 = vmatpush.xpose.msra.mxu0 %v302
        %373 = vmatpush.xpose.msra.mxu0 %v299
        %374 = vmatpush.xpose.msra.mxu0 %v296
        %375 = vmatpush.xpose.msra.mxu0 %v293
        %376 = vmatpush.xpose.msra.mxu0 %v290
        %377 = vmatpush.xpose.msra.mxu0 %v287
        %378 = vmatpush.xpose.msra.mxu0 %v284
        %379 = vmatpush.xpose.msra.mxu0 %v281
        %380 = vmatpush.xpose.msra.mxu0 %v278
        %381 = vmatpush.xpose.msra.mxu0 %v275
        %382 = vmatpush.xpose.msra.mxu0 %v272
        %383 = vmatmul.f32.gmra.mxu0 %v269
        %v384 = vpop.f32.mrf.mxu0
        %v385 = vadd.f32 %v265, %v384
        %386 = vdwg.mxu0
        %387 = vmatpush.xpose.msra.mxu0 %v365
        %388 = vmatpush.xpose.msra.mxu0 %v362
        %389 = vmatpush.xpose.msra.mxu0 %v359
        %390 = vmatpush.xpose.msra.mxu0 %v356
        %391 = vmatpush.xpose.msra.mxu0 %v353
        %392 = vmatpush.xpose.msra.mxu0 %v350
        %393 = vmatpush.xpose.msra.mxu0 %v347
        %394 = vmatpush.xpose.msra.mxu0 %v344
        %395 = vmatpush.xpose.msra.mxu0 %v341
        %396 = vmatpush.xpose.msra.mxu0 %v338
        %397 = vmatpush.xpose.msra.mxu0 %v335
        %398 = vmatpush.xpose.msra.mxu0 %v332
        %399 = vmatpush.xpose.msra.mxu0 %v329
        %400 = vmatpush.xpose.msra.mxu0 %v326
        %401 = vmatpush.xpose.msra.mxu0 %v323
        %402 = vmatpush.xpose.msra.mxu0 %v320
        %403 = vmatmul.f32.gmra.mxu0 %v269
        %v404 = vpop.f32.mrf.mxu0
        %v405 = vadd.f32 %v265, %v404
        %406 = vdwg.mxu0
        %v407 = vmax.f32 %v385, 0.0
        %v408 = vmax.f32 %v405, 0.0
        %410 = vset.pattern.permute.xlu0 0
        %411 = vperm.xlu0 %410, %v261
        %v412 = vpop.permute.xlu0 %411
        %vm414 = vcmask 39936
        %v416 = vsel %vm414, %v260, 0
        %vm418 = vcmask 1044480
        %v420 = vsel %vm418, %v407, 0
        %v423 = vsel %vm418, %v408, 0
        %425 = vmatpush.msra.mxu0 0.0
        %426 = vmatpush.msra.mxu0 0.0
        %427 = vmatpush.msra.mxu0 0.0
        %428 = vmatpush.msra.mxu0 0.0
        %429 = vmatpush.msra.mxu0 0.0
        %430 = vmatpush.msra.mxu0 0.0
        %431 = vmatpush.msra.mxu0 0.0
        %432 = vmatpush.msra.mxu0 0.0
        %433 = vmatpush.msra.mxu0 0.0
        %434 = vmatpush.msra.mxu0 0.0
        %435 = vmatpush.msra.mxu0 0.0
        %436 = vmatpush.msra.mxu0 0.0
        %437 = vmatpush.msra.mxu0 0.0
        %438 = vmatpush.msra.mxu0 0.0
        %439 = vmatpush.msra.mxu0 0.0
        %440 = vmatpush.msra.mxu0 %v420
        %441 = vmatmul.f32.gmra.mxu0 %v416
        %v442 = vpop.f32.mrf.mxu0
        %v443 = vadd.f32 %v412, %v442
        %444 = vdwg.mxu0
        %445 = vmatpush.msra.mxu0 0.0
        %446 = vmatpush.msra.mxu0 0.0
        %447 = vmatpush.msra.mxu0 0.0
        %448 = vmatpush.msra.mxu0 0.0
        %449 = vmatpush.msra.mxu0 0.0
        %450 = vmatpush.msra.mxu0 0.0
        %451 = vmatpush.msra.mxu0 0.0
        %452 = vmatpush.msra.mxu0 0.0
        %453 = vmatpush.msra.mxu0 0.0
        %454 = vmatpush.msra.mxu0 0.0
        %455 = vmatpush.msra.mxu0 0.0
        %456 = vmatpush.msra.mxu0 0.0
        %457 = vmatpush.msra.mxu0 0.0
        %458 = vmatpush.msra.mxu0 0.0
        %459 = vmatpush.msra.mxu0 0.0
        %460 = vmatpush.msra.mxu0 %v423
        %461 = vmatmul.f32.gmra.mxu0 %v416
        %v462 = vpop.f32.mrf.mxu0
        %v463 = vadd.f32 %v412, %v462
        %464 = vdwg.mxu0
        %v467 = vrot.slane %v463, 6
        %vm468 = vcmask 1041408
        %v469 = vsel %vm468, %v443, %v467
        %471 = vst [vmem:[%s218] sm:$0xf] %v469
        %s472 = sand.u32 %s137, 1
        %s473 = scalar_lea.sflag [#allocation3], %s472
        %s474 = sand.u32 %s137, 1
        %s475 = smul.addr %s474, 4
        %s476 = scalar_lea.vmem [#allocation2], %s475
        // Predicated region
        $region41: #{tpu_custom_call.1} parent=39 // pred_check
          %p477 = pneg %p147
        $region42: #{tpu_custom_call.1} parent=39 // pred_check_branch
          %479 = sbr.rel (%p477) target = $region44
        $region43: #{tpu_custom_call.1} parent=39 // pred_region
          %s480 = smul.u32 2, %s19
          %482 = vsyncadd %s473, 0
          %s483 = smul.addr %s480, 2
          %s484 = scalar_lea.hbm %s5, %s483
          %s486 = sshll.u32 %s476, 4
          %s487 = int_to_ptr.vmem [resolvable:$true] %s486
          %s488 = sshll.u32 %s484, 4
          %s489 = int_to_ptr.hbm [resolvable:$true] %s488
          %491 = dma.vmem_to_hbm [thread:$0]  %s487, 64, %s489, %s473
        $region44: #{tpu_custom_call.1} parent=39 // pred_fallthru
          _
      $region40: #{tpu_custom_call.1} parent=5 // pred_fallthru
        _
      %p492 = scmp.le.s32.totalorder 2, %s14
      // Predicated region
      $region45: #{tpu_custom_call.1} parent=5 // pred_check
        %p493 = pneg %p492
      $region46: #{tpu_custom_call.1} parent=5 // pred_check_branch
        %495 = sbr.rel (%p493) target = $region48
      $region47: #{tpu_custom_call.1} parent=5 // pred_region
        %s496 = ssub.s32 %s14, 2
        // Predicated region
        $region49: #{tpu_custom_call.1} parent=47 // pred_check
          %p497 = pneg %p153
        $region50: #{tpu_custom_call.1} parent=47 // pred_check_branch
          %499 = sbr.rel (%p497) target = $region52
        $region51: #{tpu_custom_call.1} parent=47 // pred_region
          %s500 = sand.u32 %s138, 1
          %s501 = scalar_lea.sflag [#allocation3], %s500
          %s502 = sand.u32 %s138, 1
          %s503 = smul.addr %s502, 4
          %s504 = scalar_lea.vmem [#allocation2], %s503
          %506 = dma.done %s501, 64
        $region52: #{tpu_custom_call.1} parent=47 // pred_fallthru
          _
      $region48: #{tpu_custom_call.1} parent=5 // pred_fallthru
        _
    $region6: #{tpu_custom_call.1} parent=1 // loop_footer
      %s18 = sadd.s32 1, %s14
    $region7: #{tpu_custom_call.1} parent=1 // loop_footer_branch
      %13 = sbr.rel target = $region3
    $region8: #{tpu_custom_call.1} parent=1 // loop_exit
      _
    %507 = vsyncpa [#allocation3], 1
    %s508 = scalar_lea.sflag [#allocation3], 1
    %509 = vsyncpa %s508, 1

</llo_original>
